<compile_context>
chip_gen: v6e
topology: v6e:2x2x1
jax: 0.10.0
libtpu: 0.0.40
codegen_flags: <defaults>
</compile_context>

<pallas_src>
import functools

import jax
import jax.numpy as jnp
from jax.experimental import pallas as pl
from jax.experimental.pallas import tpu as pltpu


# ----------------------------------------------------------------------------
# small helpers
# ----------------------------------------------------------------------------
def _round_up(x, m):
    return (x + m - 1) // m * m


def _pick_ff_tile(d_ff):
    for t in (1024, 512, 256, 128):
        if d_ff % t == 0:
            return t
    return d_ff  # full extent (still a legal block: equals the array dim)


def _layernorm(x, g, b, eps=1e-5):
    """LayerNorm with f32 statistics; returns f32."""
    x = x.astype(jnp.float32)
    mu = jnp.mean(x, axis=-1, keepdims=True)
    var = jnp.mean(jnp.square(x - mu), axis=-1, keepdims=True)
    return (x - mu) * jax.lax.rsqrt(var + eps) * g + b


def _softmax(s):
    m = jnp.max(s, axis=-1, keepdims=True)
    e = jnp.exp(s - m)
    return e * pl.reciprocal(jnp.sum(e, axis=-1, keepdims=True), approx=True)


# ----------------------------------------------------------------------------
# kernel 1: conv1-as-matmul patch embed + class token + pos embed + ln_pre
# ----------------------------------------------------------------------------
def embed_kernel(patch_ref, w_ref, cls_ref, pos_ref, g_ref, b_ref, out_ref):
    patches = patch_ref[0]                                                # (P, PDpad) bf16
    emb = jnp.dot(patches, w_ref[...], preferred_element_type=jnp.float32)  # (P, D) f32
    cls_row = cls_ref[...].astype(jnp.float32)                            # (1, D)
    x = jnp.concatenate([cls_row, emb], axis=0) + pos_ref[...]            # (S0, D) f32
    y = _layernorm(x, g_ref[0], b_ref[0])
    out_ref[0] = y.astype(out_ref.dtype)                                  # one full-tile store


def patch_embed_pallas(patches, w, cls_emb, pos_emb, ln_g, ln_b):
    B, P, PD = patches.shape
    D = w.shape[1]
    S0 = P + 1
    return pl.pallas_call(
        embed_kernel,
        out_shape=jax.ShapeDtypeStruct((B, S0, D), jnp.bfloat16),
        grid=(B,),
        in_specs=[
            pl.BlockSpec((1, P, PD), lambda bb: (bb, 0, 0)),
            pl.BlockSpec((PD, D), lambda bb: (0, 0)),
            pl.BlockSpec((1, D), lambda bb: (0, 0)),
            pl.BlockSpec((S0, D), lambda bb: (0, 0)),
            pl.BlockSpec((1, D), lambda bb: (0, 0)),
            pl.BlockSpec((1, D), lambda bb: (0, 0)),
        ],
        out_specs=pl.BlockSpec((1, S0, D), lambda bb: (bb, 0, 0)),
        compiler_params=pltpu.CompilerParams(
            dimension_semantics=("parallel",),
            vmem_limit_bytes=32 * 1024 * 1024),
    )(patches, w, cls_emb, pos_emb, ln_g, ln_b)


# ----------------------------------------------------------------------------
# kernel 2a: pre-LN multi-head self-attention with fused output projection
# ----------------------------------------------------------------------------
def attn_kernel(n_heads, x_ref, g1_ref, b1_ref, wqkv_ref, bqkv_ref,
                wo_ref, bo_ref, out_ref):
    x = x_ref[0]                                                          # (S, D) bf16
    S, D = x.shape
    hd = D // n_heads
    scale = 1.0 / float(hd) ** 0.5

    h = _layernorm(x, g1_ref[0], b1_ref[0]).astype(jnp.bfloat16)
    qkv = jnp.dot(h, wqkv_ref[...], preferred_element_type=jnp.float32) + bqkv_ref[0]
    q = (qkv[:, :D] * scale).astype(jnp.bfloat16)
    k = qkv[:, D:2 * D].astype(jnp.bfloat16)
    v = qkv[:, 2 * D:].astype(jnp.bfloat16)

    # per-head scores/context (K = head_dim is inherent to MHA), but a single
    # fused (S, D) @ (D, D) output projection instead of n_heads tiny matmuls.
    ctx_heads = []
    for hi in range(n_heads):
        lo = hi * hd
        qh = q[:, lo:lo + hd]
        kh = k[:, lo:lo + hd]
        vh = v[:, lo:lo + hd]
        scores = jax.lax.dot_general(
            qh, kh, (((1,), (1,)), ((), ())),
            preferred_element_type=jnp.float32)                           # (S, S)
        attn = _softmax(scores).astype(jnp.bfloat16)
        ctx_heads.append(jnp.dot(attn, vh, preferred_element_type=jnp.float32))
    ctx = jnp.concatenate(ctx_heads, axis=-1).astype(jnp.bfloat16)        # (S, D)
    proj = jnp.dot(ctx, wo_ref[...], preferred_element_type=jnp.float32) + bo_ref[0]
    out_ref[0] = (x.astype(jnp.float32) + proj).astype(out_ref.dtype)


def attention_pallas(x, blk, *, n_heads):
    B, S, D = x.shape
    kernel = functools.partial(attn_kernel, n_heads)
    return pl.pallas_call(
        kernel,
        out_shape=jax.ShapeDtypeStruct((B, S, D), x.dtype),
        grid=(B,),
        in_specs=[
            pl.BlockSpec((1, S, D), lambda bb: (bb, 0, 0)),
            pl.BlockSpec((1, D), lambda bb: (0, 0)),
            pl.BlockSpec((1, D), lambda bb: (0, 0)),
            pl.BlockSpec((D, 3 * D), lambda bb: (0, 0)),
            pl.BlockSpec((1, 3 * D), lambda bb: (0, 0)),
            pl.BlockSpec((D, D), lambda bb: (0, 0)),
            pl.BlockSpec((1, D), lambda bb: (0, 0)),
        ],
        out_specs=pl.BlockSpec((1, S, D), lambda bb: (bb, 0, 0)),
        compiler_params=pltpu.CompilerParams(
            dimension_semantics=("parallel",),
            vmem_limit_bytes=32 * 1024 * 1024),
    )(x, blk['g1'], blk['b1'], blk['wqkv'], blk['bqkv'], blk['wo'], blk['bo'])


# ----------------------------------------------------------------------------
# kernel 2b: pre-LN MLP (QuickGELU), batch folded into M, d_ff tiled + accum
# ----------------------------------------------------------------------------
def mlp_kernel(x_ref, g2_ref, b2_ref, w1_ref, bm1_ref, w2_ref, bm2_ref,
               out_ref, acc_ref):
    f = pl.program_id(1)

    @pl.when(f == 0)
    def _():
        acc_ref[...] = jnp.zeros_like(acc_ref)

    x = x_ref[...]                                                        # (tm, D) bf16
    h = _layernorm(x, g2_ref[0], b2_ref[0]).astype(jnp.bfloat16)
    ff = jnp.dot(h, w1_ref[...], preferred_element_type=jnp.float32) + bm1_ref[0]
    ff = ff * jax.nn.sigmoid(1.702 * ff)                                  # QuickGELU
    acc_ref[...] += jnp.dot(ff.astype(jnp.bfloat16), w2_ref[...],
                            preferred_element_type=jnp.float32)

    @pl.when(f == pl.num_programs(1) - 1)
    def _():
        out_ref[...] = (x.astype(jnp.float32) + acc_ref[...]
                        + bm2_ref[0]).astype(out_ref.dtype)


def mlp_pallas(x, blk):
    B, S, D = x.shape
    M = B * S
    xf = x.reshape(M, D)

    tm_target = 256
    M_pad = _round_up(M, 8)
    if M_pad > tm_target:
        M_pad = _round_up(M, tm_target)
        tm = tm_target
    else:
        tm = M_pad
    if M_pad != M:
        xf = jnp.pad(xf, ((0, M_pad - M), (0, 0)))

    d_ff = blk['w1'].shape[1]
    tff = _pick_ff_tile(d_ff)
    nf = d_ff // tff

    out = pl.pallas_call(
        mlp_kernel,
        out_shape=jax.ShapeDtypeStruct((M_pad, D), x.dtype),
        grid=(M_pad // tm, nf),
        in_specs=[
            pl.BlockSpec((tm, D), lambda i, f: (i, 0)),
            pl.BlockSpec((1, D), lambda i, f: (0, 0)),
            pl.BlockSpec((1, D), lambda i, f: (0, 0)),
            pl.BlockSpec((D, tff), lambda i, f: (0, f)),
            pl.BlockSpec((1, tff), lambda i, f: (0, f)),
            pl.BlockSpec((tff, D), lambda i, f: (f, 0)),
            pl.BlockSpec((1, D), lambda i, f: (0, 0)),
        ],
        out_specs=pl.BlockSpec((tm, D), lambda i, f: (i, 0)),
        scratch_shapes=[pltpu.VMEM((tm, D), jnp.float32)],
        compiler_params=pltpu.CompilerParams(
            dimension_semantics=("parallel", "arbitrary"),
            vmem_limit_bytes=32 * 1024 * 1024),
    )(xf, blk['g2'], blk['b2'], blk['w1'], blk['bm1'], blk['w2'], blk['bm2'])
    return out[:M].reshape(B, S, D)


# ----------------------------------------------------------------------------
# kernel 3: ln_post + visual projection + L2-normalize + logit_scale * (f @ T^T)
# ----------------------------------------------------------------------------
def head_kernel(cls_ref, g_ref, b_ref, proj_ref, text_t_ref, ls_ref, out_ref):
    x = cls_ref[...]                                                      # (B, D) bf16
    h = _layernorm(x, g_ref[0], b_ref[0]).astype(jnp.bfloat16)
    feat = jnp.dot(h, proj_ref[...], preferred_element_type=jnp.float32)  # (B, E) f32
    inv_norm = jax.lax.rsqrt(jnp.sum(feat * feat, axis=-1, keepdims=True) + 1e-12)
    feat = (feat * inv_norm).astype(jnp.bfloat16)
    sims = jnp.dot(feat, text_t_ref[...], preferred_element_type=jnp.float32)
    out_ref[...] = ls_ref[0] * sims                                       # (B, C_pad) f32


def head_pallas(cls_tok, ln_g, ln_b, proj, text, logit_scale):
    B, D = cls_tok.shape
    n_classes, E = text.shape
    C_pad = _round_up(n_classes, 128)                                     # lane-dense output
    text_t = jnp.pad(text, ((0, C_pad - n_classes), (0, 0))).T.astype(jnp.bfloat16)
    ls = jnp.reshape(logit_scale, (1,)).astype(jnp.float32)               # SMEM scalar

    out = pl.pallas_call(
        head_kernel,
        out_shape=jax.ShapeDtypeStruct((B, C_pad), jnp.float32),
        grid=(1,),
        in_specs=[
            pl.BlockSpec((B, D), lambda i: (0, 0)),
            pl.BlockSpec((1, D), lambda i: (0, 0)),
            pl.BlockSpec((1, D), lambda i: (0, 0)),
            pl.BlockSpec((D, E), lambda i: (0, 0)),
            pl.BlockSpec((E, C_pad), lambda i: (0, 0)),
            pl.BlockSpec(memory_space=pltpu.MemorySpace.SMEM),
        ],
        out_specs=pl.BlockSpec((B, C_pad), lambda i: (0, 0)),
        compiler_params=pltpu.CompilerParams(
            dimension_semantics=("arbitrary",)),
    )(cls_tok, ln_g, ln_b, proj, text_t, ls)
    return out[:, :n_classes]


# ----------------------------------------------------------------------------
# parameter init (deterministic synthetic weights, shapes per module __init__)
# ----------------------------------------------------------------------------
def init_params(key, *, D, patch_dim, S0, n_layers, d_ff, E, n_classes, prompt_num):
    keys = iter(jax.random.split(key, 8 + 4 * n_layers))
    sd = 0.02
    bf16 = jnp.bfloat16
    p = {}
    # conv1 weight (D, C, P, P) stored pre-flattened & transposed: (C*P*P, D)
    p['conv_w'] = (jax.random.normal(next(keys), (patch_dim, D), jnp.float32) * sd).astype(bf16)
    p['cls'] = (jax.random.normal(next(keys), (1, D), jnp.float32) * sd).astype(bf16)
    p['pos'] = jax.random.normal(next(keys), (S0, D), jnp.float32) * sd
    p['ln_pre_g'] = jnp.ones((1, D), jnp.float32)
    p['ln_pre_b'] = jnp.zeros((1, D), jnp.float32)
    blocks = []
    for _ in range(n_layers):
        blocks.append(dict(
            g1=jnp.ones((1, D), jnp.float32), b1=jnp.zeros((1, D), jnp.float32),
            wqkv=(jax.random.normal(next(keys), (D, 3 * D), jnp.float32) * sd).astype(bf16),
            bqkv=jnp.zeros((1, 3 * D), jnp.float32),
            wo=(jax.random.normal(next(keys), (D, D), jnp.float32) * sd).astype(bf16),
            bo=jnp.zeros((1, D), jnp.float32),
            g2=jnp.ones((1, D), jnp.float32), b2=jnp.zeros((1, D), jnp.float32),
            w1=(jax.random.normal(next(keys), (D, d_ff), jnp.float32) * sd).astype(bf16),
            bm1=jnp.zeros((1, d_ff), jnp.float32),
            w2=(jax.random.normal(next(keys), (d_ff, D), jnp.float32) * sd).astype(bf16),
            bm2=jnp.zeros((1, D), jnp.float32),
        ))
    p['blocks'] = blocks
    p['ln_post_g'] = jnp.ones((1, D), jnp.float32)
    p['ln_post_b'] = jnp.zeros((1, D), jnp.float32)
    p['proj'] = (jax.random.normal(next(keys), (D, E), jnp.float32) * sd).astype(bf16)
    # frozen pre-normalized text features (stand-in for the CLIP text encoder)
    text = jax.random.normal(next(keys), (n_classes, E), jnp.float32)
    text = text / jnp.linalg.norm(text, axis=-1, keepdims=True)
    p['text'] = text.astype(bf16)
    # deep prompt parameter: (prompt_num, 1, width) like nn.Parameter(torch.randn(...))
    p['deep_prompt'] = jax.random.normal(next(keys), (prompt_num, 1, D), jnp.float32)
    # learned logit scale, kept as a live (non-baked) scalar parameter
    p['logit_scale'] = jnp.exp(jnp.log(jnp.float32(1.0 / 0.07)))
    return p


# ----------------------------------------------------------------------------
# full forward (glue in JAX, compute in Pallas)
# ----------------------------------------------------------------------------
def deep_prompt_clip_forward(image, params, *, patch, n_heads, injection_layer):
    B, C, H, W = image.shape
    P = patch
    gh, gw = H // P, W // P

    # conv1 (stride == kernel == P, no bias) as an unfold + matmul; the
    # patch feature ordering (c, ph, pw) matches conv weight reshape(D, -1).
    x = image.reshape(B, C, gh, P, gw, P)
    x = x.transpose(0, 2, 4, 1, 3, 5).reshape(B, gh * gw, C * P * P)

    # pad patch_dim (lane axis of the patch-embed matmul) to a multiple of 128
    PD = C * P * P
    PD_pad = _round_up(PD, 128)
    patches = jnp.pad(x, ((0, 0), (0, 0), (0, PD_pad - PD))).astype(jnp.bfloat16)
    conv_w = jnp.pad(params['conv_w'], ((0, PD_pad - PD), (0, 0)))

    tokens = patch_embed_pallas(patches, conv_w, params['cls'], params['pos'],
                                params['ln_pre_g'], params['ln_pre_b'])   # (B, S0, D) bf16

    for i, blk in enumerate(params['blocks']):
        if injection_layer == i + 1:
            dp = params['deep_prompt']                                    # (Pn, 1, D)
            dp = jnp.broadcast_to(dp, (dp.shape[0], tokens.shape[0], dp.shape[2]))
            dp = jnp.transpose(dp, (1, 0, 2)).astype(tokens.dtype)        # (B, Pn, D)
            tokens = jnp.concatenate([dp, tokens], axis=1)                # prepend on seq
        tokens = attention_pallas(tokens, blk, n_heads=n_heads)
        tokens = mlp_pallas(tokens, blk)

    # matches torch x[:, 0, :] after the final permute (a prompt token if injected)
    cls_tok = tokens[:, 0, :]
    return head_pallas(cls_tok, params['ln_post_g'], params['ln_post_b'],
                       params['proj'], params['text'], params['logit_scale'])


# ----------------------------------------------------------------------------
if __name__ == "__main__":
    # TODO(synk): pretrained CLIP weights / text tokenizer+encoder are replaced
    # by deterministic synthetic parameters and frozen random text features.
    B, C, H, W = 2, 3, 16, 16
    P = 8                      # patch size -> 2x2 = 4 patches
    D = 32                     # transformer width (stand-in for 768)
    n_heads = 4
    n_layers = 2
    d_ff = 4 * D
    E = 16                     # projection / text embed dim
    n_classes = 4
    prompt_num = 2
    injection_layer = 1
    S0 = (H // P) * (W // P) + 1

    key = jax.random.PRNGKey(0)
    k_img, k_par = jax.random.split(key)
    image = jax.random.normal(k_img, (B, C, H, W), jnp.float32)
    params = init_params(k_par, D=D, patch_dim=C * P * P, S0=S0, n_layers=n_layers,
                         d_ff=d_ff, E=E, n_classes=n_classes, prompt_num=prompt_num)

    logits = deep_prompt_clip_forward(image, params, patch=P, n_heads=n_heads,
                                      injection_layer=injection_layer)
    jax.block_until_ready(logits)
    assert logits.shape == (B, n_classes) and logits.dtype == jnp.float32
    assert bool(jnp.all(jnp.isfinite(logits)))
    print("KERNEL_OK")
</pallas_src>

<mosaic_0001>
module attributes {stable_mosaic.version = 11 : i64} {
  func.func @embed_kernel(%arg0: i32, %arg1: memref<1x4x256xbf16, #tpu.memory_space<vmem>>, %arg2: memref<256x32xbf16, #tpu.memory_space<vmem>>, %arg3: memref<1x32xbf16, #tpu.memory_space<vmem>>, %arg4: memref<5x32xf32, #tpu.memory_space<vmem>>, %arg5: memref<1x32xf32, #tpu.memory_space<vmem>>, %arg6: memref<1x32xf32, #tpu.memory_space<vmem>>, %arg7: memref<1x5x32xbf16, #tpu.memory_space<vmem>>) attributes {dimension_semantics = [#tpu.dimension_semantics<parallel>], iteration_bounds = array<i64: 2>, scalar_prefetch = 0 : i64, scratch_operands = 0 : i64, tpu.core_type = #tpu.core_type<tc>, window_params = [{transform_indices = @transform_0, window_bounds = array<i64: 1, 4, 256>}, {pipeline_mode = #tpu.pipeline_mode<synchronous>, transform_indices = @transform_1, window_bounds = array<i64: 256, 32>}, {pipeline_mode = #tpu.pipeline_mode<synchronous>, transform_indices = @transform_2, window_bounds = array<i64: 1, 32>}, {pipeline_mode = #tpu.pipeline_mode<synchronous>, transform_indices = @transform_3, window_bounds = array<i64: 5, 32>}, {pipeline_mode = #tpu.pipeline_mode<synchronous>, transform_indices = @transform_4, window_bounds = array<i64: 1, 32>}, {pipeline_mode = #tpu.pipeline_mode<synchronous>, transform_indices = @transform_5, window_bounds = array<i64: 1, 32>}, {transform_indices = @transform_6, window_bounds = array<i64: 1, 5, 32>}]} {
    %c0 = arith.constant 0 : index
    %c0_0 = arith.constant 0 : index
    %c0_1 = arith.constant 0 : index
    %0 = vector.load %arg1[%c0, %c0_0, %c0_1] : memref<1x4x256xbf16, #tpu.memory_space<vmem>>, vector<1x4x256xbf16>
    %1 = vector.shape_cast %0 : vector<1x4x256xbf16> to vector<4x256xbf16>
    %c0_2 = arith.constant 0 : index
    %c0_3 = arith.constant 0 : index
    %2 = vector.load %arg2[%c0_2, %c0_3] : memref<256x32xbf16, #tpu.memory_space<vmem>>, vector<256x32xbf16>
    %cst = arith.constant dense<0.000000e+00> : vector<4x32xf32>
    %3 = tpu.matmul %1, %2, %cst {dimension_numbers = #tpu.dot_dimension_numbers<[1], [0], [0], [1], [0, 0, 1, 1], [], []>} : vector<4x256xbf16>, vector<256x32xbf16>, vector<4x32xf32> -> vector<4x32xf32>
    %c0_4 = arith.constant 0 : index
    %c0_5 = arith.constant 0 : index
    %4 = vector.load %arg3[%c0_4, %c0_5] : memref<1x32xbf16, #tpu.memory_space<vmem>>, vector<1x32xbf16>
    %5 = arith.extf %4 : vector<1x32xbf16> to vector<1x32xf32>
    %6 = tpu.concatenate %5, %3 in 0 : vector<1x32xf32>, vector<4x32xf32> -> vector<5x32xf32>
    %c0_6 = arith.constant 0 : index
    %c0_7 = arith.constant 0 : index
    %7 = vector.load %arg4[%c0_6, %c0_7] : memref<5x32xf32, #tpu.memory_space<vmem>>, vector<5x32xf32>
    %8 = arith.addf %6, %7 : vector<5x32xf32>
    %c0_8 = arith.constant 0 : index
    %c0_9 = arith.constant 0 : index
    %9 = vector.load %arg5[%c0_8, %c0_9] : memref<1x32xf32, #tpu.memory_space<vmem>>, vector<1x32xf32>
    %10 = vector.shape_cast %9 : vector<1x32xf32> to vector<32xf32>
    %c0_10 = arith.constant 0 : index
    %c0_11 = arith.constant 0 : index
    %11 = vector.load %arg6[%c0_10, %c0_11] : memref<1x32xf32, #tpu.memory_space<vmem>>, vector<1x32xf32>
    %12 = vector.shape_cast %11 : vector<1x32xf32> to vector<32xf32>
    %cst_12 = arith.constant dense<0.000000e+00> : vector<5xf32>
    %13 = vector.multi_reduction <add>, %8, %cst_12 [1] : vector<5x32xf32> to vector<5xf32>
    %14 = vector.shape_cast %13 : vector<5xf32> to vector<5x1xf32>
    %cst_13 = arith.constant 3.200000e+01 : f32
    %15 = vector.broadcast %cst_13 : f32 to vector<5x1xf32>
    %16 = arith.divf %14, %15 : vector<5x1xf32>
    %17 = vector.broadcast %16 : vector<5x1xf32> to vector<5x32xf32>
    %18 = arith.subf %8, %17 : vector<5x32xf32>
    %19 = arith.mulf %18, %18 : vector<5x32xf32>
    %cst_14 = arith.constant dense<0.000000e+00> : vector<5xf32>
    %20 = vector.multi_reduction <add>, %19, %cst_14 [1] : vector<5x32xf32> to vector<5xf32>
    %21 = vector.shape_cast %20 : vector<5xf32> to vector<5x1xf32>
    %cst_15 = arith.constant 3.200000e+01 : f32
    %22 = vector.broadcast %cst_15 : f32 to vector<5x1xf32>
    %23 = arith.divf %21, %22 : vector<5x1xf32>
    %24 = vector.broadcast %16 : vector<5x1xf32> to vector<5x32xf32>
    %25 = arith.subf %8, %24 : vector<5x32xf32>
    %cst_16 = arith.constant 9.99999974E-6 : f32
    %26 = vector.broadcast %cst_16 : f32 to vector<5x1xf32>
    %27 = arith.addf %23, %26 : vector<5x1xf32>
    %28 = math.rsqrt %27 : vector<5x1xf32>
    %29 = vector.broadcast %28 : vector<5x1xf32> to vector<5x32xf32>
    %30 = arith.mulf %25, %29 : vector<5x32xf32>
    %31 = vector.shape_cast %10 : vector<32xf32> to vector<1x32xf32>
    %32 = vector.broadcast %31 : vector<1x32xf32> to vector<5x32xf32>
    %33 = arith.mulf %30, %32 : vector<5x32xf32>
    %34 = vector.shape_cast %12 : vector<32xf32> to vector<1x32xf32>
    %35 = vector.broadcast %34 : vector<1x32xf32> to vector<5x32xf32>
    %36 = arith.addf %33, %35 : vector<5x32xf32>
    %37 = arith.truncf %36 : vector<5x32xf32> to vector<5x32xbf16>
    %c0_17 = arith.constant 0 : index
    %c0_18 = arith.constant 0 : index
    %c0_19 = arith.constant 0 : index
    %38 = vector.load %arg7[%c0_17, %c0_18, %c0_19] : memref<1x5x32xbf16, #tpu.memory_space<vmem>>, vector<1x5x32xbf16>
    %39 = vector.shape_cast %38 : vector<1x5x32xbf16> to vector<5x32xbf16>
    %40 = vector.shape_cast %37 : vector<5x32xbf16> to vector<1x5x32xbf16>
    tpu.vector_store %arg7[%c0_17, %c0_18, %c0_19], %40 {strides = array<i32>} : memref<1x5x32xbf16, #tpu.memory_space<vmem>>, vector<1x5x32xbf16>,
    return
  }
  func.func @transform_0(%arg0: i32) -> (i32, i32, i32) {
    %c0_i32 = arith.constant 0 : i32
    %c0_i32_0 = arith.constant 0 : i32
    %c0_i32_1 = arith.constant 0 : i32
    return %arg0, %c0_i32, %c0_i32_0 : i32, i32, i32
  }
  func.func @transform_1(%arg0: i32) -> (i32, i32) {
    %c0_i32 = arith.constant 0 : i32
    %c0_i32_0 = arith.constant 0 : i32
    %c0_i32_1 = arith.constant 0 : i32
    return %c0_i32, %c0_i32_0 : i32, i32
  }
  func.func @transform_2(%arg0: i32) -> (i32, i32) {
    %c0_i32 = arith.constant 0 : i32
    %c0_i32_0 = arith.constant 0 : i32
    %c0_i32_1 = arith.constant 0 : i32
    return %c0_i32, %c0_i32_0 : i32, i32
  }
  func.func @transform_3(%arg0: i32) -> (i32, i32) {
    %c0_i32 = arith.constant 0 : i32
    %c0_i32_0 = arith.constant 0 : i32
    %c0_i32_1 = arith.constant 0 : i32
    return %c0_i32, %c0_i32_0 : i32, i32
  }
  func.func @transform_4(%arg0: i32) -> (i32, i32) {
    %c0_i32 = arith.constant 0 : i32
    %c0_i32_0 = arith.constant 0 : i32
    %c0_i32_1 = arith.constant 0 : i32
    return %c0_i32, %c0_i32_0 : i32, i32
  }
  func.func @transform_5(%arg0: i32) -> (i32, i32) {
    %c0_i32 = arith.constant 0 : i32
    %c0_i32_0 = arith.constant 0 : i32
    %c0_i32_1 = arith.constant 0 : i32
    return %c0_i32, %c0_i32_0 : i32, i32
  }
  func.func @transform_6(%arg0: i32) -> (i32, i32, i32) {
    %c0_i32 = arith.constant 0 : i32
    %c0_i32_0 = arith.constant 0 : i32
    %c0_i32_1 = arith.constant 0 : i32
    return %arg0, %c0_i32, %c0_i32_0 : i32, i32, i32
  }
}

</mosaic_0001>

<llo_original>
// kernel: tpu_custom_call.1
$region0: #{tpu_custom_call.1}
  #allocation0 [shape = 'u32[]', space=smem, size = 0x4, offset = 0x4, fixed_abs, tag = 'smem constant byte address 0x4 - core index']
  #allocation1 [shape = 'u32[144,128]{1,0:T(1,128)}', space=vmem, size = 0x12000, scoped, tag = 'internal scratch']
  %s0 = inlined_call_operand.vmem [shape: bf16[2,4,256], index: 0, kind: input, shape index: {}]
  %s1 = inlined_call_operand.vmem [shape: bf16[256,32], index: 1, kind: input, shape index: {}]
  %s2 = inlined_call_operand.vmem [shape: bf16[1,32], index: 2, kind: input, shape index: {}]
  %s3 = inlined_call_operand.vmem [shape: f32[5,32], index: 3, kind: input, shape index: {}]
  %s4 = inlined_call_operand.vmem [shape: f32[1,32], index: 4, kind: input, shape index: {}]
  %s5 = inlined_call_operand.vmem [shape: f32[1,32], index: 5, kind: input, shape index: {}]
  %s6 = inlined_call_operand.vmem [shape: bf16[2,5,32], index: 6, kind: output, shape index: {}]
  %s7 = sld [smem:[#allocation0]]
  $region57: #{tpu_custom_call.1} parent=0
    _
  %s9 = ssub.s32 1, %s7
  %s10 = scalar_select 0, %s9, %s7
  loop: start=0, step=1, limit=4
  $region2: #{tpu_custom_call.1} parent=0 // loop_pre_header
    _
  $region3: #{tpu_custom_call.1} parent=0 // loop_header
    %s12 = sphi 0, %s16
    %p13 = scmp.ge.s32.totalorder %s12, 4
    %s22 = sphi 0, %s24
    %s25 = sphi 0, %s22
    %s26 = sphi 0, %s25
    %s42 = sphi 0, %s26
    %s46 = sphi 0, %s46
    %s48 = sphi 0, %s46
    %s49 = sphi 0, %s48
    %s63 = sphi 0, %s49
    %s67 = sphi 0, %s67
    %s69 = sphi 0, %s67
    %s70 = sphi 0, %s69
    %s84 = sphi 0, %s70
    %s88 = sphi 0, %s88
    %s90 = sphi 0, %s88
    %s91 = sphi 0, %s90
    %s105 = sphi 0, %s91
    %s109 = sphi 0, %s109
    %s111 = sphi 0, %s109
    %s112 = sphi 0, %s111
    %s126 = sphi 0, %s112
    %s130 = sphi 0, %s130
    %s132 = sphi 0, %s130
    %s133 = sphi 0, %s132
    %s147 = sphi 0, %s133
    %s153 = sphi 0, %s155
    %s156 = sphi 0, %s153
    %s157 = sphi 0, %s156
    %s173 = sphi 0, %s157
  $region4: #{tpu_custom_call.1} parent=0 // loop_header_branch
    %15 = sbr.rel (%p13) target = $region8
  $region5: #{tpu_custom_call.1} parent=0 // loop_body
    %s17 = ssub.s32 %s12, 1
    %s18 = ssub.s32 %s12, 2
    %s19 = sadd.s32 %s12, 1
    %s20 = ssub.s32 %s12, %s19
    %p21 = scmp.eq.s32.totalorder %s20, 0
    %s23 = sadd.s32 %s22, 1
    %s24 = scalar_select %p21, %s22, %s23
    %p27 = pneg %p21
    %p28 = scmp.eq.s32.totalorder %s12, 1
    %p29 = por %p27, %p28
    %p30 = scmp.ne.s32.totalorder %s22, %s25
    %p31 = scmp.eq.s32.totalorder %s12, 0
    %p32 = por %p30, %p31
    %p33 = scmp.ne.s32.totalorder %s22, %s25
    %p34 = scmp.eq.s32.totalorder %s17, 1
    %p35 = por %p33, %p34
    %p36 = scmp.ne.s32.totalorder %s25, %s26
    %p37 = scmp.eq.s32.totalorder %s17, 0
    %p38 = por %p36, %p37
    %p39 = scmp.ne.s32.totalorder %s25, %s26
    %p40 = scmp.eq.s32.totalorder %s18, 1
    %p41 = por %p39, %p40
    %p43 = scmp.ne.s32.totalorder %s26, %s42
    %p44 = scmp.eq.s32.totalorder %s18, 0
    %p45 = por %p43, %p44
    %s47 = sadd.s32 %s46, 1
    %p50 = scmp.eq.s32.totalorder %s12, 1
    %p51 = scmp.ne.s32.totalorder %s46, %s48
    %p52 = scmp.eq.s32.totalorder %s12, 0
    %p53 = por %p51, %p52
    %p54 = scmp.ne.s32.totalorder %s46, %s48
    %p55 = scmp.eq.s32.totalorder %s17, 1
    %p56 = por %p54, %p55
    %p57 = scmp.ne.s32.totalorder %s48, %s49
    %p58 = scmp.eq.s32.totalorder %s17, 0
    %p59 = por %p57, %p58
    %p60 = scmp.ne.s32.totalorder %s48, %s49
    %p61 = scmp.eq.s32.totalorder %s18, 1
    %p62 = por %p60, %p61
    %p64 = scmp.ne.s32.totalorder %s49, %s63
    %p65 = scmp.eq.s32.totalorder %s18, 0
    %p66 = por %p64, %p65
    %s68 = sadd.s32 %s67, 1
    %p71 = scmp.eq.s32.totalorder %s12, 1
    %p72 = scmp.ne.s32.totalorder %s67, %s69
    %p73 = scmp.eq.s32.totalorder %s12, 0
    %p74 = por %p72, %p73
    %p75 = scmp.ne.s32.totalorder %s67, %s69
    %p76 = scmp.eq.s32.totalorder %s17, 1
    %p77 = por %p75, %p76
    %p78 = scmp.ne.s32.totalorder %s69, %s70
    %p79 = scmp.eq.s32.totalorder %s17, 0
    %p80 = por %p78, %p79
    %p81 = scmp.ne.s32.totalorder %s69, %s70
    %p82 = scmp.eq.s32.totalorder %s18, 1
    %p83 = por %p81, %p82
    %p85 = scmp.ne.s32.totalorder %s70, %s84
    %p86 = scmp.eq.s32.totalorder %s18, 0
    %p87 = por %p85, %p86
    %s89 = sadd.s32 %s88, 1
    %p92 = scmp.eq.s32.totalorder %s12, 1
    %p93 = scmp.ne.s32.totalorder %s88, %s90
    %p94 = scmp.eq.s32.totalorder %s12, 0
    %p95 = por %p93, %p94
    %p96 = scmp.ne.s32.totalorder %s88, %s90
    %p97 = scmp.eq.s32.totalorder %s17, 1
    %p98 = por %p96, %p97
    %p99 = scmp.ne.s32.totalorder %s90, %s91
    %p100 = scmp.eq.s32.totalorder %s17, 0
    %p101 = por %p99, %p100
    %p102 = scmp.ne.s32.totalorder %s90, %s91
    %p103 = scmp.eq.s32.totalorder %s18, 1
    %p104 = por %p102, %p103
    %p106 = scmp.ne.s32.totalorder %s91, %s105
    %p107 = scmp.eq.s32.totalorder %s18, 0
    %p108 = por %p106, %p107
    %s110 = sadd.s32 %s109, 1
    %p113 = scmp.eq.s32.totalorder %s12, 1
    %p114 = scmp.ne.s32.totalorder %s109, %s111
    %p115 = scmp.eq.s32.totalorder %s12, 0
    %p116 = por %p114, %p115
    %p117 = scmp.ne.s32.totalorder %s109, %s111
    %p118 = scmp.eq.s32.totalorder %s17, 1
    %p119 = por %p117, %p118
    %p120 = scmp.ne.s32.totalorder %s111, %s112
    %p121 = scmp.eq.s32.totalorder %s17, 0
    %p122 = por %p120, %p121
    %p123 = scmp.ne.s32.totalorder %s111, %s112
    %p124 = scmp.eq.s32.totalorder %s18, 1
    %p125 = por %p123, %p124
    %p127 = scmp.ne.s32.totalorder %s112, %s126
    %p128 = scmp.eq.s32.totalorder %s18, 0
    %p129 = por %p127, %p128
    %s131 = sadd.s32 %s130, 1
    %p134 = scmp.eq.s32.totalorder %s12, 1
    %p135 = scmp.ne.s32.totalorder %s130, %s132
    %p136 = scmp.eq.s32.totalorder %s12, 0
    %p137 = por %p135, %p136
    %p138 = scmp.ne.s32.totalorder %s130, %s132
    %p139 = scmp.eq.s32.totalorder %s17, 1
    %p140 = por %p138, %p139
    %p141 = scmp.ne.s32.totalorder %s132, %s133
    %p142 = scmp.eq.s32.totalorder %s17, 0
    %p143 = por %p141, %p142
    %p144 = scmp.ne.s32.totalorder %s132, %s133
    %p145 = scmp.eq.s32.totalorder %s18, 1
    %p146 = por %p144, %p145
    %p148 = scmp.ne.s32.totalorder %s133, %s147
    %p149 = scmp.eq.s32.totalorder %s18, 0
    %p150 = por %p148, %p149
    %s151 = ssub.s32 %s12, %s19
    %p152 = scmp.eq.s32.totalorder %s151, 0
    %s154 = sadd.s32 %s153, 1
    %s155 = scalar_select %p152, %s153, %s154
    %p158 = pneg %p152
    %p159 = scmp.eq.s32.totalorder %s12, 1
    %p160 = por %p158, %p159
    %p161 = scmp.ne.s32.totalorder %s153, %s156
    %p162 = scmp.eq.s32.totalorder %s12, 0
    %p163 = por %p161, %p162
    %p164 = scmp.ne.s32.totalorder %s153, %s156
    %p165 = scmp.eq.s32.totalorder %s17, 1
    %p166 = por %p164, %p165
    %p167 = scmp.ne.s32.totalorder %s156, %s157
    %p168 = scmp.eq.s32.totalorder %s17, 0
    %p169 = por %p167, %p168
    %p170 = scmp.ne.s32.totalorder %s156, %s157
    %p171 = scmp.eq.s32.totalorder %s18, 1
    %p172 = por %p170, %p171
    %p174 = scmp.ne.s32.totalorder %s157, %s173
    %p175 = scmp.eq.s32.totalorder %s18, 0
    %p176 = por %p174, %p175
    %p177 = scmp.le.s32.totalorder 1, %s12
    %p178 = scmp.lt.s32.totalorder %s12, 3
    %p179 = pnand %p177, %p178
    %p180 = pneg %p179
    // Predicated region
    $region9: #{tpu_custom_call.1} parent=5 // pred_check
      _
    $region10: #{tpu_custom_call.1} parent=5 // pred_check_branch
      %182 = sbr.rel (%p179) target = $region12
    $region11: #{tpu_custom_call.1} parent=5 // pred_region
      %s183 = ssub.s32 %s12, 1
      // Predicated region
      $region13: #{tpu_custom_call.1} parent=11 // pred_check
        %p184 = pneg %p59
      $region14: #{tpu_custom_call.1} parent=11 // pred_check_branch
        %186 = sbr.rel (%p184) target = $region16
      $region15: #{tpu_custom_call.1} parent=11 // pred_region
        _
      $region16: #{tpu_custom_call.1} parent=11 // pred_fallthru
        _
      // Predicated region
      $region17: #{tpu_custom_call.1} parent=11 // pred_check
        %p187 = pneg %p80
      $region18: #{tpu_custom_call.1} parent=11 // pred_check_branch
        %189 = sbr.rel (%p187) target = $region20
      $region19: #{tpu_custom_call.1} parent=11 // pred_region
        _
      $region20: #{tpu_custom_call.1} parent=11 // pred_fallthru
        _
      // Predicated region
      $region21: #{tpu_custom_call.1} parent=11 // pred_check
        %p190 = pneg %p101
      $region22: #{tpu_custom_call.1} parent=11 // pred_check_branch
        %192 = sbr.rel (%p190) target = $region24
      $region23: #{tpu_custom_call.1} parent=11 // pred_region
        _
      $region24: #{tpu_custom_call.1} parent=11 // pred_fallthru
        _
      // Predicated region
      $region25: #{tpu_custom_call.1} parent=11 // pred_check
        %p193 = pneg %p122
      $region26: #{tpu_custom_call.1} parent=11 // pred_check_branch
        %195 = sbr.rel (%p193) target = $region28
      $region27: #{tpu_custom_call.1} parent=11 // pred_region
        _
      $region28: #{tpu_custom_call.1} parent=11 // pred_fallthru
        _
      // Predicated region
      $region29: #{tpu_custom_call.1} parent=11 // pred_check
        %p196 = pneg %p143
      $region30: #{tpu_custom_call.1} parent=11 // pred_check_branch
        %198 = sbr.rel (%p196) target = $region32
      $region31: #{tpu_custom_call.1} parent=11 // pred_region
        _
      $region32: #{tpu_custom_call.1} parent=11 // pred_fallthru
        _
    $region12: #{tpu_custom_call.1} parent=5 // pred_fallthru
      _
    %p199 = scmp.lt.s32.totalorder %s12, 2
    // Predicated region
    $region33: #{tpu_custom_call.1} parent=5 // pred_check
      %p200 = pneg %p199
    $region34: #{tpu_custom_call.1} parent=5 // pred_check_branch
      %202 = sbr.rel (%p200) target = $region36
    $region35: #{tpu_custom_call.1} parent=5 // pred_region
      // Predicated region
      $region37: #{tpu_custom_call.1} parent=35 // pred_check
        %p203 = pneg %p32
      $region38: #{tpu_custom_call.1} parent=35 // pred_check_branch
        %205 = sbr.rel (%p203) target = $region40
      $region39: #{tpu_custom_call.1} parent=35 // pred_region
        %p206 = scmp.lt.s32.totalorder %s12, 1
        %s207 = scalar_select %p206, %s12, 1
        %s208 = smul.addr %s207, 2
        %s209 = smul.addr %s208, 2
        %s210 = scalar_lea.vmem %s0, %s209
      $region40: #{tpu_custom_call.1} parent=35 // pred_fallthru
        _
    $region36: #{tpu_custom_call.1} parent=5 // pred_fallthru
      _
    %p211 = scmp.le.s32.totalorder 1, %s12
    %p212 = scmp.lt.s32.totalorder %s12, 3
    %p213 = pnand %p211, %p212
    %p214 = pneg %p213
    // Predicated region
    $region41: #{tpu_custom_call.1} parent=5 // pred_check
      _
    $region42: #{tpu_custom_call.1} parent=5 // pred_check_branch
      %216 = sbr.rel (%p213) target = $region44
    $region43: #{tpu_custom_call.1} parent=5 // pred_region
      %s217 = ssub.s32 %s12, 1
      %p218 = scmp.lt.s32.totalorder %s17, 1
      %s219 = scalar_select %p218, %s17, 1
      %s220 = smul.addr %s219, 2
      %s221 = smul.addr %s220, 2
      %s222 = scalar_lea.vmem %s0, %s221
      %p223 = pneg %p38
      %p224 = pneg %p35
      %p225 = pneg %p59
      %p226 = pneg %p56
      %p227 = pneg %p80
      %p228 = pneg %p77
      %p229 = pneg %p101
      %p230 = pneg %p98
      %p231 = pneg %p122
      %p232 = pneg %p119
      %p233 = pneg %p143
      %p234 = pneg %p140
      %p235 = pneg %p169
      %p236 = pneg %p166
      %p237 = scmp.lt.s32.totalorder %s17, 1
      %s238 = scalar_select %p237, %s17, 1
      %s239 = smul.addr %s238, 4
      %s240 = scalar_lea.vmem %s6, %s239
      %p241 = scmp.lt.s32.totalorder %s17, 1
      %s242 = scalar_select %p241, %s17, 1
      %s243 = smul.addr %s242, 2
      %s244 = smul.addr %s243, 2
      %s245 = scalar_lea.vmem %s0, %s244
      %p246 = scmp.lt.s32.totalorder %s17, 1
      %s247 = scalar_select %p246, %s17, 1
      %s248 = smul.addr %s247, 4
      %s249 = scalar_lea.vmem %s6, %s248
      %v251 = vld [vmem:[%s245] sm:$0xf]
      %v252 = vld [vmem:[%s1] sm:$0xf]
      %v253 = vld [vmem:[%s1 + $0x4] sm:$0xf]
      %v254 = vld [vmem:[%s1 + $0x8] sm:$0xf]
      %v255 = vld [vmem:[%s1 + $0xc] sm:$0xf]
      %v256 = vld [vmem:[%s1 + $0x10] sm:$0xf]
      %v257 = vld [vmem:[%s1 + $0x14] sm:$0xf]
      %v258 = vld [vmem:[%s1 + $0x18] sm:$0xf]
      %v259 = vld [vmem:[%s1 + $0x1c] sm:$0xf]
      %v260 = vld [vmem:[%s1 + $0x20] sm:$0xf]
      %v261 = vld [vmem:[%s1 + $0x24] sm:$0xf]
      %v262 = vld [vmem:[%s1 + $0x28] sm:$0xf]
      %v263 = vld [vmem:[%s1 + $0x2c] sm:$0xf]
      %v264 = vld [vmem:[%s1 + $0x30] sm:$0xf]
      %v265 = vld [vmem:[%s1 + $0x34] sm:$0xf]
      %v266 = vld [vmem:[%s1 + $0x38] sm:$0xf]
      %v267 = vld [vmem:[%s1 + $0x3c] sm:$0xf]
      %v268 = vld [vmem:[%s1 + $0x40] sm:$0xf]
      %v269 = vld [vmem:[%s1 + $0x44] sm:$0xf]
      %v270 = vld [vmem:[%s1 + $0x48] sm:$0xf]
      %v271 = vld [vmem:[%s1 + $0x4c] sm:$0xf]
      %v272 = vld [vmem:[%s1 + $0x50] sm:$0xf]
      %v273 = vld [vmem:[%s1 + $0x54] sm:$0xf]
      %v274 = vld [vmem:[%s1 + $0x58] sm:$0xf]
      %v275 = vld [vmem:[%s1 + $0x5c] sm:$0xf]
      %v276 = vld [vmem:[%s1 + $0x60] sm:$0xf]
      %v277 = vld [vmem:[%s1 + $0x64] sm:$0xf]
      %v278 = vld [vmem:[%s1 + $0x68] sm:$0xf]
      %v279 = vld [vmem:[%s1 + $0x6c] sm:$0xf]
      %v280 = vld [vmem:[%s1 + $0x70] sm:$0xf]
      %v281 = vld [vmem:[%s1 + $0x74] sm:$0xf]
      %v282 = vld [vmem:[%s1 + $0x78] sm:$0xf]
      %v283 = vld [vmem:[%s1 + $0x7c] sm:$0xf]
      %v286 = vunpack.c.l.s4 1983009808
      %v287 = vunpack.c.0.s8 %v286
      %v288 = vlaneseq
      %v289 = vshrl.u32 %v288, 7
      %v290 = vsub.s32 %v287, %v289
      %v291 = vrot.slane %v251, %v290
      %v292 = vcombine.high %v291, %v291
      %v327 = vunpack.c.l.b16 %v252
      %v328 = vunpack.c.l.b16 %v253
      %v329 = vunpack.c.l.b16 %v254
      %v330 = vunpack.c.l.b16 %v255
      %v331 = vunpack.c.l.b16 %v256
      %v332 = vunpack.c.l.b16 %v257
      %v333 = vunpack.c.l.b16 %v258
      %v334 = vunpack.c.l.b16 %v259
      %v335 = vunpack.c.l.b16 %v260
      %v336 = vunpack.c.l.b16 %v261
      %v337 = vunpack.c.l.b16 %v262
      %v338 = vunpack.c.l.b16 %v263
      %v339 = vunpack.c.l.b16 %v264
      %v340 = vunpack.c.l.b16 %v265
      %v341 = vunpack.c.l.b16 %v266
      %v342 = vunpack.c.l.b16 %v267
      %v343 = vunpack.c.l.b16 %v268
      %v344 = vunpack.c.l.b16 %v269
      %v345 = vunpack.c.l.b16 %v270
      %v346 = vunpack.c.l.b16 %v271
      %v347 = vunpack.c.l.b16 %v272
      %v348 = vunpack.c.l.b16 %v273
      %v349 = vunpack.c.l.b16 %v274
      %v350 = vunpack.c.l.b16 %v275
      %v351 = vunpack.c.l.b16 %v276
      %v352 = vunpack.c.l.b16 %v277
      %v353 = vunpack.c.l.b16 %v278
      %v354 = vunpack.c.l.b16 %v279
      %v355 = vunpack.c.l.b16 %v280
      %v356 = vunpack.c.l.b16 %v281
      %v357 = vunpack.c.l.b16 %v282
      %v358 = vunpack.c.l.b16 %v283
      %v359 = vpack.c.b16 %v328, %v327
      %v360 = vpack.c.b16 %v330, %v329
      %v361 = vpack.c.b16 %v332, %v331
      %v362 = vpack.c.b16 %v334, %v333
      %v363 = vpack.c.b16 %v336, %v335
      %v364 = vpack.c.b16 %v338, %v337
      %v365 = vpack.c.b16 %v340, %v339
      %v366 = vpack.c.b16 %v342, %v341
      %v367 = vpack.c.b16 %v344, %v343
      %v368 = vpack.c.b16 %v346, %v345
      %v369 = vpack.c.b16 %v348, %v347
      %v370 = vpack.c.b16 %v350, %v349
      %v371 = vpack.c.b16 %v352, %v351
      %v372 = vpack.c.b16 %v354, %v353
      %v373 = vpack.c.b16 %v356, %v355
      %v374 = vpack.c.b16 %v358, %v357
      %391 = vmatprep.subr.bf16.mxu0 0
      %392 = vmatpush1.bf16.msra.mxu0 %v366
      %393 = vmatprep.subr.bf16.mxu0 0
      %394 = vmatpush1.bf16.msra.mxu0 %v365
      %395 = vmatprep.subr.bf16.mxu0 0
      %396 = vmatpush1.bf16.msra.mxu0 %v364
      %397 = vmatprep.subr.bf16.mxu0 0
      %398 = vmatpush1.bf16.msra.mxu0 %v363
      %399 = vmatprep.subr.bf16.mxu0 0
      %400 = vmatpush1.bf16.msra.mxu0 %v362
      %401 = vmatprep.subr.bf16.mxu0 0
      %402 = vmatpush1.bf16.msra.mxu0 %v361
      %403 = vmatprep.subr.bf16.mxu0 0
      %404 = vmatpush1.bf16.msra.mxu0 %v360
      %405 = vmatprep.subr.bf16.mxu0 0
      %406 = vmatpush1.bf16.msra.mxu0 %v359
      %407 = vmatprep.subr.bf16.mxu0 0
      %408 = vmatpush2.bf16.msra.mxu0 %v374
      %409 = vmatprep.subr.bf16.mxu0 0
      %410 = vmatpush2.bf16.msra.mxu0 %v373
      %411 = vmatprep.subr.bf16.mxu0 0
      %412 = vmatpush2.bf16.msra.mxu0 %v372
      %413 = vmatprep.subr.bf16.mxu0 0
      %414 = vmatpush2.bf16.msra.mxu0 %v371
      %415 = vmatprep.subr.bf16.mxu0 0
      %416 = vmatpush2.bf16.msra.mxu0 %v370
      %417 = vmatprep.subr.bf16.mxu0 0
      %418 = vmatpush2.bf16.msra.mxu0 %v369
      %419 = vmatprep.subr.bf16.mxu0 0
      %420 = vmatpush2.bf16.msra.mxu0 %v368
      %421 = vmatprep.subr.bf16.mxu0 0
      %422 = vmatpush2.bf16.msra.mxu0 %v367
      %423 = vmatprep.mubr.bf16.mxu0 %v292
      %424 = vmatmul.mubr.bf16.gmra.mxu0 %v291
      %v425 = vpop.f32.mrf.mxu0
      %v426 = vadd.f32 0.0, %v425
      %v427 = vpop.f32.mrf.mxu0
      %v428 = vpop.f32.mrf.mxu0
      %v429 = vpop.f32.mrf.mxu0
      %430 = vdwg.mxu0
      %v431 = vld [vmem:[%s2] sm:$0x1]
      %v432 = vunpack.c.l.bf16 %v431
      %v434 = vrot.slane %v426, 7
      %vm436 = vcmask 1040384
      %v437 = vsel %vm436, %v432, %v434
      %v438 = vld [vmem:[%s3] sm:$0x1f]
      %v439 = vadd.f32 %v437, %v438
      %v440 = vld [vmem:[%s4] sm:$0x1]
      %v441 = vld [vmem:[%s5] sm:$0x1]
      %vm442 = vcmask 258048
      %v443 = vsel %vm442, %v439, 0.0
      %444 = vadd.xlane.f32.xlu0 %v443
      %v445 = vpop.xlane.xlu0 %444
      %v446 = vrcp.pop 32.0
      %v447 = vmul.f32 %v445, %v446
      %v448 = vsub.f32 %v439, %v447
      %v449 = vmul.f32 %v448, %v448
      %v450 = vsel %vm442, %v449, 0.0
      %451 = vadd.xlane.f32.xlu0 %v450
      %v452 = vpop.xlane.xlu0 %451
      %v453 = vmul.f32 %v452, %v446
      %v454 = vadd.f32 %v453, 1e-05
      %v455 = vrsqrt.pop %v454
      %v456 = vmul.f32 %v448, %v455
      %v458 = vlaneseq
      %v459 = vshrl.u32 %v458, 7
      %v460 = vsub.s32 0, %v459
      %v461 = vrot.slane %v440, %v460
      %v463 = vmul.f32 %v456, %v461
      %v465 = vlaneseq
      %v466 = vshrl.u32 %v465, 7
      %v467 = vsub.s32 0, %v466
      %v468 = vrot.slane %v441, %v467
      %v470 = vadd.f32 %v463, %v468
      %v471 = vpack.c.bf16 %v470, %v470
      %vm472 = vcmask 256000
      %vm473 = vsmask.f32 2304
      %vm474 = vmand %vm472, %vm473
      %v475 = vld [vmem:[%s249] sm:$0x7]
      %v476 = vsel %vm474, %v471, %v475
      %477 = vst [vmem:[%s249] sm:$0x7] %v476
      %p478 = scmp.lt.s32.totalorder %s17, 1
      %s479 = scalar_select %p478, %s17, 1
      %s480 = smul.addr %s479, 4
      %s481 = scalar_lea.vmem %s6, %s480
      // Predicated region
      $region45: #{tpu_custom_call.1} parent=43 // pred_check
        %p482 = pneg %p166
      $region46: #{tpu_custom_call.1} parent=43 // pred_check_branch
        %484 = sbr.rel (%p482) target = $region48
      $region47: #{tpu_custom_call.1} parent=43 // pred_region
        _
      $region48: #{tpu_custom_call.1} parent=43 // pred_fallthru
        _
    $region44: #{tpu_custom_call.1} parent=5 // pred_fallthru
      _
    %p485 = scmp.le.s32.totalorder 2, %s12
    // Predicated region
    $region49: #{tpu_custom_call.1} parent=5 // pred_check
      %p486 = pneg %p485
    $region50: #{tpu_custom_call.1} parent=5 // pred_check_branch
      %488 = sbr.rel (%p486) target = $region52
    $region51: #{tpu_custom_call.1} parent=5 // pred_region
      %s489 = ssub.s32 %s12, 2
      // Predicated region
      $region53: #{tpu_custom_call.1} parent=51 // pred_check
        %p490 = pneg %p172
      $region54: #{tpu_custom_call.1} parent=51 // pred_check_branch
        %492 = sbr.rel (%p490) target = $region56
      $region55: #{tpu_custom_call.1} parent=51 // pred_region
        %p493 = scmp.lt.s32.totalorder %s18, 1
        %s494 = scalar_select %p493, %s18, 1
        %s495 = smul.addr %s494, 4
        %s496 = scalar_lea.vmem %s6, %s495
      $region56: #{tpu_custom_call.1} parent=51 // pred_fallthru
        _
    $region52: #{tpu_custom_call.1} parent=5 // pred_fallthru
      _
  $region6: #{tpu_custom_call.1} parent=0 // loop_footer
    %s16 = sadd.s32 1, %s12
  $region7: #{tpu_custom_call.1} parent=0 // loop_footer_branch
    %11 = sbr.rel target = $region3
  $region8: #{tpu_custom_call.1} parent=0 // loop_exit
    _

</llo_original>
